<compile_context>
chip_gen: v7x
topology: tpu7x:2x2x1
jax: 0.10.0
libtpu: 0.0.40
codegen_flags: <defaults>
</compile_context>

<pallas_src>
import functools
import numpy as np

import jax
import jax.numpy as jnp
from jax import lax
from jax.experimental import pallas as pl
from jax.experimental.pallas import tpu as pltpu

_LANES = 128
_SUBLANES = 8


def _gan_loss_sum_kernel(t_ref, x_ref, o_ref, *, use_lsgan, single_log,
                         tiles_per_core, total_tiles, rows, tile_rows, regular):
    # t_ref : (1, 1) SMEM f32          target label (real or fake)
    # x_ref : (tile_rows, 128) VMEM    one tile of the flat prediction (native dtype)
    # o_ref : (1, 8, 128) VMEM f32     this core's partial-sum block (resident over i)
    c = pl.program_id(0)            # TensorCore split ("parallel")
    i = pl.program_id(1)            # tile index within this core ("arbitrary")
    g = c * tiles_per_core + i      # global tile index

    @pl.when(i == 0)
    def _():
        o_ref[...] = jnp.zeros_like(o_ref)

    x = x_ref[...].astype(jnp.float32)
    t = t_ref[0, 0]

    if use_lsgan:
        d = x - t
        per_elem = d * d                                        # nn.MSELoss
    elif single_log:
        # nn.BCELoss with hard 0/1 labels: one transcendental per element.
        per_elem = -jnp.maximum(jnp.log(jnp.where(t >= 0.5, x, 1.0 - x)), -100.0)
    else:
        # nn.BCELoss with (possibly smoothed) labels; PyTorch clamps log at -100.
        log_x = jnp.maximum(jnp.log(x), -100.0)
        log_1mx = jnp.maximum(jnp.log(1.0 - x), -100.0)
        per_elem = -(t * log_x + (1.0 - t) * log_1mx)

    def fold(v):   # (tile_rows, 128) -> (1, 8, 128) with pure vreg adds (VPU only)
        return v.reshape(tile_rows // _SUBLANES, _SUBLANES, _LANES).sum(
            axis=0, keepdims=True)

    folded = fold(per_elem)

    if regular:
        # Every tile is full and every grid point maps to a real tile.
        o_ref[...] += folded
    else:
        last_g = total_tiles - 1
        rows_last = rows - last_g * tile_rows       # valid rows in the last tile

        @pl.when(g < last_g)
        def _():                                    # steady state: no mask at all
            o_ref[...] += folded

        @pl.when(g == last_g)
        def _():                                    # last real tile: mask garbage rows
            if rows_last < tile_rows:
                ridx = lax.broadcasted_iota(jnp.int32, (tile_rows, _LANES), 0)
                masked = jnp.where(ridx < rows_last, per_elem, 0.0)
                o_ref[...] += fold(masked)
            else:
                o_ref[...] += folded
        # g > last_g: phantom tile of the 2-core split -> contributes nothing.


def gan_loss(pred, target_is_real, *, use_lsgan=True,
             target_real_label=1.0, target_fake_label=0.0,
             max_tile_rows=2048):
    """GANLoss.forward(pred, target_is_real). Returns a scalar f32 loss."""
    n = int(np.prod(pred.shape))
    t = jnp.where(jnp.asarray(target_is_real),
                  jnp.float32(target_real_label),
                  jnp.float32(target_fake_label))
    single_log = (not use_lsgan) and \
        {float(target_real_label), float(target_fake_label)} <= {0.0, 1.0}

    def per_elem_jax(x):   # pure-JAX per-element loss (tail / tiny-input path)
        xf = x.astype(jnp.float32)
        if use_lsgan:
            return (xf - t) ** 2
        if single_log:
            return -jnp.maximum(jnp.log(jnp.where(t >= 0.5, xf, 1.0 - xf)), -100.0)
        return -(t * jnp.maximum(jnp.log(xf), -100.0)
                 + (1.0 - t) * jnp.maximum(jnp.log(1.0 - xf), -100.0))

    flat = pred.reshape(-1)                  # native dtype, layout-preserving
    rows = n // _LANES                       # full lane-dense rows for the kernel
    # Sublane packing of the native dtype: 8 rows (f32) / 16 (bf16,f16) / 32 (int8).
    pack = _SUBLANES * max(1, 4 // max(1, jnp.dtype(flat.dtype).itemsize))

    if rows < pack:
        # Tiny prediction map: kernel launch overhead dominates; stay in fused XLA.
        return jnp.sum(per_elem_jax(flat)) / jnp.float32(n)

    body_n = rows * _LANES
    tail_sum = (jnp.sum(per_elem_jax(flat[body_n:]))
                if body_n < n else jnp.float32(0.0))

    tile_cap = max(pack, (int(max_tile_rows) // pack) * pack)
    tile_rows = min(tile_cap, (rows // pack) * pack)
    total_tiles = pl.cdiv(rows, tile_rows)
    ncores = 2 if total_tiles > 1 else 1     # shard tiles across v7x's 2 TCs
    tpc = pl.cdiv(total_tiles, ncores)       # tiles per core
    regular = (rows % tile_rows == 0) and (ncores * tpc == total_tiles)

    x2d = (flat if body_n == n else flat[:body_n]).reshape(rows, _LANES)

    kernel = functools.partial(
        _gan_loss_sum_kernel, use_lsgan=use_lsgan, single_log=single_log,
        tiles_per_core=tpc, total_tiles=total_tiles, rows=rows,
        tile_rows=tile_rows, regular=regular)

    partials = pl.pallas_call(
        kernel,
        out_shape=jax.ShapeDtypeStruct((ncores, _SUBLANES, _LANES), jnp.float32),
        grid=(ncores, tpc),
        in_specs=[
            pl.BlockSpec(memory_space=pltpu.MemorySpace.SMEM),        # target label
            pl.BlockSpec((tile_rows, _LANES),
                         lambda c, i: (jnp.minimum(c * tpc + i, total_tiles - 1), 0)),
        ],
        out_specs=pl.BlockSpec((1, _SUBLANES, _LANES), lambda c, i: (c, 0, 0)),
        compiler_params=pltpu.CompilerParams(
            dimension_semantics=("parallel", "arbitrary")),
    )(t.reshape(1, 1), x2d)

    # Cross-lane reduce of the (ncores, 8, 128) partials + tail + 'mean' divide.
    return (jnp.sum(partials) + tail_sum) / jnp.float32(n)


def _gan_loss_ref(pred, target_is_real, *, use_lsgan=True,
                  target_real_label=1.0, target_fake_label=0.0):
    """Pure-JAX re-implementation of GANLoss.forward (matches PyTorch)."""
    t = jnp.where(jnp.asarray(target_is_real),
                  jnp.float32(target_real_label), jnp.float32(target_fake_label))
    x = pred.astype(jnp.float32)
    if use_lsgan:
        return jnp.mean((x - t) ** 2)
    log_x = jnp.maximum(jnp.log(x), -100.0)
    log_1mx = jnp.maximum(jnp.log(1.0 - x), -100.0)
    return jnp.mean(-(t * log_x + (1.0 - t) * log_1mx))


if __name__ == "__main__":
    key = jax.random.PRNGKey(0)
    k1, k2, k3 = jax.random.split(key, 3)

    # Discriminator-style prediction maps.
    pred = 0.5 * jax.random.normal(k1, (2, 4, 16, 16), jnp.float32) + 0.7
    prob = jax.nn.sigmoid(jax.random.normal(k2, (2, 4, 16, 16), jnp.float32))
    pred_odd = 0.5 * jax.random.normal(k3, (2, 3, 17, 13), jnp.float32) + 0.7  # 1326 elems
    pred_bf16 = pred.astype(jnp.bfloat16)

    cases = [
        # (input, target_is_real, use_lsgan, real_label, fake_label, kwargs)
        (pred,      True,  True,  1.0, 0.0, {}),                     # LSGAN real
        (pred,      False, True,  1.0, 0.0, {}),                     # LSGAN fake
        (pred,      True,  True,  1.0, 0.0, dict(max_tile_rows=8)),  # multi-tile / 2-core split
        (prob,      True,  False, 1.0, 0.0, {}),                     # BCE real (single-log)
        (prob,      False, False, 1.0, 0.0, {}),                     # BCE fake (single-log)
        (prob,      True,  False, 0.9, 0.1, {}),                     # BCE smoothed labels (two-log)
        (pred_odd,  True,  True,  1.0, 0.0, {}),                     # masked last tile + JAX tail
        (pred_bf16, False, True,  1.0, 0.0, {}),                     # native bf16 input
    ]
    for x, is_real, lsgan, rl, fl, kw in cases:
        out = jax.block_until_ready(
            gan_loss(x, is_real, use_lsgan=lsgan,
                     target_real_label=rl, target_fake_label=fl, **kw))
        ref = _gan_loss_ref(x, is_real, use_lsgan=lsgan,
                            target_real_label=rl, target_fake_label=fl)
        np.testing.assert_allclose(np.asarray(out), np.asarray(ref),
                                   rtol=1e-5, atol=1e-6)
    print("KERNEL_OK")
</pallas_src>

<mosaic_0001>
module attributes {stable_mosaic.version = 11 : i64} {
  func.func @_gan_loss_sum_kernel(%arg0: i32, %arg1: i32, %arg2: memref<1x1xf32, #tpu.memory_space<smem>>, %arg3: memref<16x128xf32, #tpu.memory_space<vmem>>, %arg4: memref<1x8x128xf32, #tpu.memory_space<vmem>>) attributes {dimension_semantics = [#tpu.dimension_semantics<parallel>, #tpu.dimension_semantics<arbitrary>], iteration_bounds = array<i64: 1, 1>, scalar_prefetch = 0 : i64, scratch_operands = 0 : i64, tpu.core_type = #tpu.core_type<tc>, window_params = [{transform_indices = @transform_0, window_bounds = array<i64: 1, 1>}, {transform_indices = @transform_1, window_bounds = array<i64: 16, 128>}, {transform_indices = @transform_2, window_bounds = array<i64: 1, 8, 128>}]} {
    %c0_i32 = arith.constant 0 : i32
    %0 = arith.cmpi eq, %arg1, %c0_i32 : i32
    %1 = arith.extui %0 : i1 to i32
    %c0_i32_0 = arith.constant 0 : i32
    %2 = arith.cmpi ne, %1, %c0_i32_0 : i32
    scf.if %2 {
      %cst_10 = arith.constant 0.000000e+00 : f32
      %14 = vector.broadcast %cst_10 : f32 to vector<1x8x128xf32>
      %c0_11 = arith.constant 0 : index
      %c0_12 = arith.constant 0 : index
      %c0_13 = arith.constant 0 : index
      %15 = vector.load %arg4[%c0_11, %c0_12, %c0_13] : memref<1x8x128xf32, #tpu.memory_space<vmem>>, vector<1x8x128xf32>
      tpu.vector_store %arg4[%c0_11, %c0_12, %c0_13], %14 {strides = array<i32>} : memref<1x8x128xf32, #tpu.memory_space<vmem>>, vector<1x8x128xf32>,
    } else {
    }
    %c0 = arith.constant 0 : index
    %c0_1 = arith.constant 0 : index
    %3 = vector.load %arg3[%c0, %c0_1] : memref<16x128xf32, #tpu.memory_space<vmem>>, vector<16x128xf32>
    %c0_2 = arith.constant 0 : index
    %c0_3 = arith.constant 0 : index
    %4 = memref.load %arg2[%c0_2, %c0_3] : memref<1x1xf32, #tpu.memory_space<smem>>
    %5 = vector.broadcast %4 : f32 to vector<16x128xf32>
    %6 = arith.subf %3, %5 : vector<16x128xf32>
    %7 = arith.mulf %6, %6 : vector<16x128xf32>
    %8 = vector.shape_cast %7 : vector<16x128xf32> to vector<2x8x128xf32>
    %cst = arith.constant dense<0.000000e+00> : vector<8x128xf32>
    %9 = vector.multi_reduction <add>, %8, %cst [0] : vector<2x8x128xf32> to vector<8x128xf32>
    %10 = vector.shape_cast %9 : vector<8x128xf32> to vector<1x8x128xf32>
    %c0_4 = arith.constant 0 : index
    %c0_5 = arith.constant 0 : index
    %c0_6 = arith.constant 0 : index
    %11 = vector.load %arg4[%c0_4, %c0_5, %c0_6] : memref<1x8x128xf32, #tpu.memory_space<vmem>>, vector<1x8x128xf32>
    %12 = arith.addf %11, %10 : vector<1x8x128xf32>
    %c0_7 = arith.constant 0 : index
    %c0_8 = arith.constant 0 : index
    %c0_9 = arith.constant 0 : index
    %13 = vector.load %arg4[%c0_7, %c0_8, %c0_9] : memref<1x8x128xf32, #tpu.memory_space<vmem>>, vector<1x8x128xf32>
    tpu.vector_store %arg4[%c0_7, %c0_8, %c0_9], %12 {strides = array<i32>} : memref<1x8x128xf32, #tpu.memory_space<vmem>>, vector<1x8x128xf32>,
    return
  }
  func.func @transform_0(%arg0: i32, %arg1: i32) -> (i32, i32) {
    %c0_i32 = arith.constant 0 : i32
    %c0_i32_0 = arith.constant 0 : i32
    %c0_i32_1 = arith.constant 0 : i32
    return %c0_i32, %c0_i32_0 : i32, i32
  }
  func.func @transform_1(%arg0: i32, %arg1: i32) -> (i32, i32) {
    %c1_i32 = arith.constant 1 : i32
    %0 = arith.muli %arg0, %c1_i32 : i32
    %1 = arith.addi %0, %arg1 : i32
    %c0_i32 = arith.constant 0 : i32
    %2 = arith.minsi %1, %c0_i32 : i32
    %c0_i32_0 = arith.constant 0 : i32
    %c0_i32_1 = arith.constant 0 : i32
    return %2, %c0_i32_0 : i32, i32
  }
  func.func @transform_2(%arg0: i32, %arg1: i32) -> (i32, i32, i32) {
    %c0_i32 = arith.constant 0 : i32
    %c0_i32_0 = arith.constant 0 : i32
    %c0_i32_1 = arith.constant 0 : i32
    return %arg0, %c0_i32, %c0_i32_0 : i32, i32, i32
  }
}

</mosaic_0001>

<llo_original>
// kernel: tpu_custom_call.1
$region0: #{tpu_custom_call.1}
  #allocation0 [shape = 'u32[]', space=smem, size = 0x4, offset = 0x4, fixed_abs, tag = 'smem constant byte address 0x4 - core index']
  #allocation1 [shape = 'u32[144,128]{1,0:T(1,128)}', space=vmem, size = 0x12000, scoped, tag = 'internal scratch']
  #allocation2 [shape = 'f32[1,1]{1,0:T(1,128)S(6)}', space=smem, size = 0x200, scoped, tag = 'scoped memory for tpu_custom_call.1']
  %s0 = inlined_call_operand.<no memory space> [shape: f32[1,1], index: 0, kind: input, shape index: {}]
  %s1 = inlined_call_operand.hbm [shape: f32[16,128], index: 1, kind: input, shape index: {}]
  %s2 = inlined_call_operand.hbm [shape: f32[1,8,128], index: 2, kind: output, shape index: {}]
  %s3 = sld [smem:[#allocation0]]
  $region26: #{tpu_custom_call.1} parent=0
    _
  %s5 = ssub.s32 1, %s3
  %s6 = scalar_select 0, %s5, %s3
  %7 = sst [smem:[#allocation2]] %s0
  $region1: #{tpu_custom_call.1} parent=0
    #allocation3 [shape = 'u8[8192]{0}', space=vmem, size = 0x2000, scoped, tag = 'input window, operand 1, single buffered']
    #allocation4 [shape = 's32[1]{0}', space=sflag, size = 0x4, scoped, tag = 'scoped memory for tpu_custom_call.1']
    #allocation5 [shape = 's32[1]{0}', space=sflag, size = 0x4, scoped, tag = 'scoped memory for tpu_custom_call.1']
    #allocation6 [shape = 'u8[4096]{0}', space=vmem, size = 0x1000, scoped, tag = 'output window, operand 0, single buffered']
    %8 = vsyncpa [#allocation4], 0
    %9 = vsyncpa [#allocation5], 0
    // Predicated region
    $region2: #{tpu_custom_call.1} parent=1 // pred_check
      _
    $region3: #{tpu_custom_call.1} parent=1 // pred_check_branch
      %11 = sbr.rel (0) target = $region5
    $region4: #{tpu_custom_call.1} parent=1 // pred_region
      _
    $region5: #{tpu_custom_call.1} parent=1 // pred_fallthru
      _
    // Predicated region
    $region6: #{tpu_custom_call.1} parent=1 // pred_check
      _
    $region7: #{tpu_custom_call.1} parent=1 // pred_check_branch
      %13 = sbr.rel (0) target = $region9
    $region8: #{tpu_custom_call.1} parent=1 // pred_region
      %s14 = sadd.s32 0, 0
      %p15 = scmp.lt.s32.totalorder %s14, 0
      %s16 = scalar_select %p15, %s14, 0
      %s17 = smul.u32 2, %s16
      %s19 = ssub.s32 256, 256
      %20 = vsyncadd [#allocation4], %s19
      %s21 = smul.addr %s17, 128
      %s22 = scalar_lea.hbm %s1, %s21
      %s23 = sshll.u32 [#allocation3], 4
      %s24 = int_to_ptr.vmem [resolvable:$true] %s23
      %29 = dma.hbm_to_vmem [thread:$0]  %s22, 256, %s24, [#allocation4], 128, 128, 8
    $region9: #{tpu_custom_call.1} parent=1 // pred_fallthru
      _
    // Predicated region
    $region10: #{tpu_custom_call.1} parent=1 // pred_check
      _
    $region11: #{tpu_custom_call.1} parent=1 // pred_check_branch
      %31 = sbr.rel (0) target = $region13
    $region12: #{tpu_custom_call.1} parent=1 // pred_region
      %32 = dma.done [#allocation4], 256
    $region13: #{tpu_custom_call.1} parent=1 // pred_fallthru
      _
    %s33 = sadd.s32 0, 0
    %p34 = scmp.lt.s32.totalorder %s33, 0
    %s35 = scalar_select %p34, %s33, 0
    %s36 = smul.u32 2, %s35
    %p37 = scmp.eq.s32.totalorder 0, 0
    // Predicated region
    $region14: #{tpu_custom_call.1} parent=1 // pred_check
      %p38 = pneg %p37
    $region15: #{tpu_custom_call.1} parent=1 // pred_check_branch
      %40 = sbr.rel (%p38) target = $region17
    $region16: #{tpu_custom_call.1} parent=1 // pred_region
      %41 = vst [vmem:[#allocation6] sm:$0xff] 0.0
    $region17: #{tpu_custom_call.1} parent=1 // pred_fallthru
      _
    %v42 = vld [vmem:[#allocation3] sm:$0xff]
    %v43 = vld [vmem:[#allocation3 + $0x8] sm:$0xff]
    %s44 = sld [smem:[#allocation2]]
    %v45 = vstv %s44
    %v46 = vsub.f32 %v42, %v45
    %v47 = vsub.f32 %v43, %v45
    %v48 = vmul.f32 %v46, %v46
    %v49 = vmul.f32 %v47, %v47
    %v50 = vadd.f32 %v48, %v49
    %v51 = vld [vmem:[#allocation6] sm:$0xff]
    %v52 = vadd.f32 %v51, %v50
    %53 = vst [vmem:[#allocation6] sm:$0xff] %v52
    // Predicated region
    $region18: #{tpu_custom_call.1} parent=1 // pred_check
      _
    $region19: #{tpu_custom_call.1} parent=1 // pred_check_branch
      %55 = sbr.rel (0) target = $region21
    $region20: #{tpu_custom_call.1} parent=1 // pred_region
      %s57 = ssub.s32 128, 128
      %58 = vsyncadd [#allocation5], %s57
      %s60 = sshll.u32 [#allocation6], 4
      %s61 = int_to_ptr.vmem [resolvable:$true] %s60
      %63 = dma.vmem_to_hbm [thread:$0]  %s61, 128, %s2, [#allocation5]
    $region21: #{tpu_custom_call.1} parent=1 // pred_fallthru
      _
    // Predicated region
    $region22: #{tpu_custom_call.1} parent=1 // pred_check
      _
    $region23: #{tpu_custom_call.1} parent=1 // pred_check_branch
      %65 = sbr.rel (0) target = $region25
    $region24: #{tpu_custom_call.1} parent=1 // pred_region
      %66 = dma.done [#allocation5], 128
    $region25: #{tpu_custom_call.1} parent=1 // pred_fallthru
      _
    %67 = vsyncpa [#allocation4], 1
    %68 = vsyncpa [#allocation5], 1

</llo_original>
